<compile_context>
chip_gen: v7x
topology: tpu7x:2x2x1
jax: 0.10.0
libtpu: 0.0.40
codegen_flags: <defaults>
</compile_context>

<pallas_src>
import jax
import jax.numpy as jnp
from jax.experimental import pallas as pl
from jax.experimental.pallas import tpu as pltpu

GAMMA = 2.0          # module default; kernel uses an explicit square for this value
SIZE_AVERAGE = True
_NEG = -1e30         # mask value for out-of-bounds class lanes


def _round_up(x, m):
    return (x + m - 1) // m * m


def _cdiv(a, b):
    return (a + b - 1) // b


def _make_kernel(n, c, tile_n, c_pad):
    """Build the kernel as a closure over the static problem sizes."""
    need_col_mask = (c_pad != c)          # partial edge block along the class axis
    need_row_mask = (n % tile_n) != 0     # partial edge block along the batch axis

    def kernel(x_ref, t_ref, a_ref, out_ref):
        # x_ref:   (TILE_N, C_pad) logits, native dtype            (VMEM)
        # t_ref:   (TILE_N, 1)     int32 targets                   (VMEM)
        # a_ref:   (TILE_N, 1)     f32 alpha[targets]              (VMEM)
        # out_ref: (1, 1)          f32 partial sum for this tile   (SMEM)
        x = x_ref[...].astype(jnp.float32)      # cast after DMA (bf16-friendly)
        t = t_ref[...]                          # (TILE_N, 1)
        a = a_ref[...]                          # (TILE_N, 1)

        tn, cp = x.shape
        col = jax.lax.broadcasted_iota(jnp.int32, (tn, cp), 1)
        if need_col_mask:
            # Undefined VMEM lanes past C: force to -1e30 BEFORE max/exp so they
            # never win the max and underflow to 0 in the exp-sum.
            x = jnp.where(col < c, x, _NEG)
        sel = col == t                          # exactly one True per valid row

        # log-sum-exp over the class axis.
        m = jnp.max(x, axis=-1, keepdims=True)                       # (TILE_N, 1)
        s = jnp.sum(jnp.exp(x - m), axis=-1, keepdims=True)          # (TILE_N, 1)
        # Gather target logit with a select + reduce (kept separate from the
        # exp-sum so log_p stays finite even for badly-classified rows).
        x_sel = jnp.sum(jnp.where(sel, x, 0.0), axis=-1, keepdims=True)

        log_p = (x_sel - m) - jnp.log(s)        # = log(softmax(x)[target]), finite
        p = jnp.exp(log_p)
        omp = 1.0 - p
        # gamma = 2.0 -> explicit square (avoids pow -> log+exp on the EUP).
        batch_loss = -a * (omp * omp) * log_p   # (TILE_N, 1)

        if need_row_mask:
            # Rows past N in the last block hold undefined data (possibly NaN);
            # exclude them from the partial sum.  jnp.where does not propagate
            # NaN from the unselected branch.
            row = jax.lax.broadcasted_iota(jnp.int32, (tn, 1), 0)
            valid = (pl.program_id(0) * tile_n + row) < n
            batch_loss = jnp.where(valid, batch_loss, 0.0)

        out_ref[0, 0] = jnp.sum(batch_loss)

    return kernel


def focal_loss(inputs, targets, alpha_vec, *, size_average=SIZE_AVERAGE):
    """inputs: (N, C) float, targets: (N,) int, alpha_vec: (C,) float -> scalar f32."""
    n, c = inputs.shape
    itemsize = int(jnp.dtype(inputs.dtype).itemsize)

    # Lane-align the class axis (block shape only; the array itself is NOT padded).
    c_pad = max(128, _round_up(c, 128))

    # Tile sizing: ~32 MiB total for 2 double-buffered input tiles plus ~3
    # f32-sized in-kernel intermediates (cast copy, exp, selects).  This stays
    # well under v7x's 64 MiB physical VMEM and needs vmem_limit_bytes raised
    # on v5e (16 MiB scoped default).
    per_row_bytes = c_pad * (2 * itemsize + 3 * 4)
    budget_bytes = 32 * 1024 * 1024
    tile_n = max(8, min(16384, (budget_bytes // per_row_bytes) // 8 * 8))
    tile_n = min(tile_n, _round_up(n, 8))       # don't over-allocate for tiny batches
    if n > 16 and _cdiv(n, tile_n) < 2:
        # Keep both v7x TensorCores fed on the "parallel" grid axis.
        tile_n = max(8, _round_up(_cdiv(n, 2), 8))
    num_tiles = _cdiv(n, tile_n)

    # Cheap wrapper-side prep: targets as (N,1) int32, alpha gathered per-row
    # (removes a full (TILE_N, C_pad) select + lane-reduction from the kernel).
    t2 = targets.reshape(n, 1).astype(jnp.int32)
    alpha_t = alpha_vec.astype(jnp.float32)[targets.reshape(-1)].reshape(n, 1)

    kernel = _make_kernel(n, c, tile_n, c_pad)

    partials = pl.pallas_call(
        kernel,
        out_shape=jax.ShapeDtypeStruct((num_tiles, 1), jnp.float32),
        grid_spec=pltpu.PrefetchScalarGridSpec(
            num_scalar_prefetch=0,
            grid=(num_tiles,),
            in_specs=[
                pl.BlockSpec((tile_n, c_pad), lambda i: (i, 0)),   # logits tile
                pl.BlockSpec((tile_n, 1), lambda i: (i, 0)),       # targets tile
                pl.BlockSpec((tile_n, 1), lambda i: (i, 0)),       # alpha[targets] tile
            ],
            out_specs=pl.BlockSpec((1, 1), lambda i: (i, 0),
                                   memory_space=pltpu.MemorySpace.SMEM),
        ),
        compiler_params=pltpu.CompilerParams(
            dimension_semantics=("parallel",),
            vmem_limit_bytes=48 * 1024 * 1024,
        ),
        cost_estimate=pl.CostEstimate(
            flops=int(8 * n * c_pad),
            transcendentals=int(n * c_pad + 3 * n),
            bytes_accessed=int(n * c * itemsize + n * 8 + num_tiles * 4),
        ),
    )(inputs, t2, alpha_t)

    total = jnp.sum(partials)
    if size_average:
        return total / jnp.float32(n)
    return total


def focal_loss_ref(inputs, targets, alpha_vec, *, size_average=SIZE_AVERAGE):
    """Pure-JAX reference mirroring the PyTorch forward."""
    x = inputs.astype(jnp.float32)
    log_p_all = jax.nn.log_softmax(x, axis=-1)
    log_pt = jnp.take_along_axis(log_p_all, targets.reshape(-1, 1), axis=1)
    pt = jnp.exp(log_pt)
    alpha = alpha_vec.astype(jnp.float32)[targets].reshape(-1, 1)
    batch_loss = -alpha * (1.0 - pt) ** GAMMA * log_pt
    return jnp.mean(batch_loss) if size_average else jnp.sum(batch_loss)


if __name__ == "__main__":
    key = jax.random.PRNGKey(0)
    cases = [
        ((8, 16), jnp.float32),    # single tile, class-axis edge masking
        ((37, 21), jnp.float32),   # 2 tiles (megacore split), row + col edge masking
        ((37, 21), jnp.bfloat16),  # in-kernel bf16 -> f32 cast path
    ]
    for (N, C), dt in cases:
        kx, kt, key = jax.random.split(key, 3)
        inputs = jax.random.normal(kx, (N, C), dtype=jnp.float32).astype(dt)
        targets = jax.random.randint(kt, (N,), 0, C, dtype=jnp.int32)
        # Module default: alpha = ones(class_num, 1) (deterministic init).
        alpha_vec = jnp.ones((C,), dtype=jnp.float32)

        loss = jax.block_until_ready(focal_loss(inputs, targets, alpha_vec))
        ref = jax.block_until_ready(focal_loss_ref(inputs, targets, alpha_vec))
        assert jnp.allclose(loss, ref, rtol=1e-4, atol=1e-5), (N, C, dt, loss, ref)

    print("KERNEL_OK")
</pallas_src>

<mosaic_0001>
module attributes {stable_mosaic.version = 11 : i64} {
  func.func @kernel(%arg0: i32, %arg1: memref<8x128xf32, #tpu.memory_space<vmem>>, %arg2: memref<8x1xi32, #tpu.memory_space<vmem>>, %arg3: memref<8x1xf32, #tpu.memory_space<vmem>>, %arg4: memref<1x1xf32, #tpu.memory_space<smem>>) attributes {dimension_semantics = [#tpu.dimension_semantics<parallel>], iteration_bounds = array<i64: 1>, scalar_prefetch = 0 : i64, scratch_operands = 0 : i64, tpu.core_type = #tpu.core_type<tc>, window_params = [{transform_indices = @transform_0, window_bounds = array<i64: 8, 128>}, {transform_indices = @transform_1, window_bounds = array<i64: 8, 1>}, {transform_indices = @transform_2, window_bounds = array<i64: 8, 1>}, {transform_indices = @transform_3, window_bounds = array<i64: 1, 1>}]} {
    %c0 = arith.constant 0 : index
    %c0_0 = arith.constant 0 : index
    %0 = vector.load %arg1[%c0, %c0_0] : memref<8x128xf32, #tpu.memory_space<vmem>>, vector<8x128xf32>
    %c0_1 = arith.constant 0 : index
    %c0_2 = arith.constant 0 : index
    %1 = vector.load %arg2[%c0_1, %c0_2] : memref<8x1xi32, #tpu.memory_space<vmem>>, vector<8x1xi32>
    %c0_3 = arith.constant 0 : index
    %c0_4 = arith.constant 0 : index
    %2 = vector.load %arg3[%c0_3, %c0_4] : memref<8x1xf32, #tpu.memory_space<vmem>>, vector<8x1xf32>
    %3 = tpu.iota {dimensions = array<i32: 1>} : vector<8x128xi32>
    %c16_i32 = arith.constant 16 : i32
    %4 = vector.broadcast %c16_i32 : i32 to vector<8x128xi32>
    %5 = arith.cmpi slt, %3, %4 : vector<8x128xi32>
    %cst = arith.constant -1.000000e+30 : f32
    %6 = vector.broadcast %cst : f32 to vector<8x128xf32>
    %7 = arith.select %5, %0, %6 : vector<8x128xi1>, vector<8x128xf32>
    %8 = vector.broadcast %1 : vector<8x1xi32> to vector<8x128xi32>
    %9 = arith.cmpi eq, %3, %8 : vector<8x128xi32>
    %cst_5 = arith.constant dense<0xFF800000> : vector<8xf32>
    %10 = vector.multi_reduction <maximumf>, %7, %cst_5 [1] : vector<8x128xf32> to vector<8xf32>
    %11 = vector.shape_cast %10 : vector<8xf32> to vector<8x1xf32>
    %12 = vector.broadcast %11 : vector<8x1xf32> to vector<8x128xf32>
    %13 = arith.subf %7, %12 : vector<8x128xf32>
    %14 = math.exp %13 : vector<8x128xf32>
    %cst_6 = arith.constant dense<0.000000e+00> : vector<8xf32>
    %15 = vector.multi_reduction <add>, %14, %cst_6 [1] : vector<8x128xf32> to vector<8xf32>
    %16 = vector.shape_cast %15 : vector<8xf32> to vector<8x1xf32>
    %cst_7 = arith.constant 0.000000e+00 : f32
    %17 = vector.broadcast %cst_7 : f32 to vector<8x128xf32>
    %18 = arith.select %9, %7, %17 : vector<8x128xi1>, vector<8x128xf32>
    %cst_8 = arith.constant dense<0.000000e+00> : vector<8xf32>
    %19 = vector.multi_reduction <add>, %18, %cst_8 [1] : vector<8x128xf32> to vector<8xf32>
    %20 = vector.shape_cast %19 : vector<8xf32> to vector<8x1xf32>
    %21 = arith.subf %20, %11 : vector<8x1xf32>
    %22 = math.log %16 : vector<8x1xf32>
    %23 = arith.subf %21, %22 : vector<8x1xf32>
    %24 = math.exp %23 : vector<8x1xf32>
    %cst_9 = arith.constant 1.000000e+00 : f32
    %25 = vector.broadcast %cst_9 : f32 to vector<8x1xf32>
    %26 = arith.subf %25, %24 : vector<8x1xf32>
    %cst_10 = arith.constant 0.000000e+00 : f32
    %27 = vector.broadcast %cst_10 : f32 to vector<8x1xf32>
    %28 = arith.subf %27, %2 : vector<8x1xf32>
    %29 = arith.mulf %26, %26 : vector<8x1xf32>
    %30 = arith.mulf %28, %29 : vector<8x1xf32>
    %31 = arith.mulf %30, %23 : vector<8x1xf32>
    %32 = vector.shape_cast %31 : vector<8x1xf32> to vector<1x8x1xf32>
    %cst_11 = arith.constant dense<0.000000e+00> : vector<1xf32>
    %33 = vector.multi_reduction <add>, %32, %cst_11 [1, 2] : vector<1x8x1xf32> to vector<1xf32>
    %34 = vector.shape_cast %33 : vector<1xf32> to vector<1x1x1xf32>
    %35 = vector.extract %34[0, 0, 0] : f32 from vector<1x1x1xf32>
    %c0_12 = arith.constant 0 : index
    %c0_13 = arith.constant 0 : index
    %36 = memref.load %arg4[%c0_12, %c0_13] : memref<1x1xf32, #tpu.memory_space<smem>>
    memref.store %35, %arg4[%c0_12, %c0_13] : memref<1x1xf32, #tpu.memory_space<smem>>
    return
  }
  func.func @transform_0(%arg0: i32) -> (i32, i32) {
    %c0_i32 = arith.constant 0 : i32
    %c0_i32_0 = arith.constant 0 : i32
    return %arg0, %c0_i32 : i32, i32
  }
  func.func @transform_1(%arg0: i32) -> (i32, i32) {
    %c0_i32 = arith.constant 0 : i32
    %c0_i32_0 = arith.constant 0 : i32
    return %arg0, %c0_i32 : i32, i32
  }
  func.func @transform_2(%arg0: i32) -> (i32, i32) {
    %c0_i32 = arith.constant 0 : i32
    %c0_i32_0 = arith.constant 0 : i32
    return %arg0, %c0_i32 : i32, i32
  }
  func.func @transform_3(%arg0: i32) -> (i32, i32) {
    %c0_i32 = arith.constant 0 : i32
    %c0_i32_0 = arith.constant 0 : i32
    return %arg0, %c0_i32 : i32, i32
  }
}

</mosaic_0001>

<llo_original>
// kernel: tpu_custom_call.1
$region0: #{tpu_custom_call.1}
  #allocation0 [shape = 'u32[]', space=smem, size = 0x4, offset = 0x4, fixed_abs, tag = 'smem constant byte address 0x4 - core index']
  #allocation1 [shape = 'u32[144,128]{1,0:T(1,128)}', space=vmem, size = 0x12000, scoped, tag = 'internal scratch']
  %s0 = inlined_call_operand.vmem [shape: f32[8,16], index: 0, kind: input, shape index: {}]
  %s1 = inlined_call_operand.vmem [shape: s32[8,1], index: 1, kind: input, shape index: {}]
  %s2 = inlined_call_operand.vmem [shape: f32[8,1], index: 2, kind: input, shape index: {}]
  %s3 = inlined_call_operand.hbm [shape: f32[1,1], index: 3, kind: output, shape index: {}]
  %s4 = sld [smem:[#allocation0]]
  $region22: #{tpu_custom_call.1} parent=0
    _
  %s6 = ssub.s32 1, %s4
  %s7 = scalar_select 0, %s6, %s4
  $region1: #{tpu_custom_call.1} parent=0
    #allocation2 [shape = 'u8[512]{0}', space=smem, size = 0x200, scoped, tag = 'output window, operand 0, single buffered']
    #allocation3 [shape = 's32[1]{0}', space=sflag, size = 0x4, scoped, tag = 'scoped memory for tpu_custom_call.1']
    %8 = vsyncpa [#allocation3], 0
    // Predicated region
    $region2: #{tpu_custom_call.1} parent=1 // pred_check
      _
    $region3: #{tpu_custom_call.1} parent=1 // pred_check_branch
      %10 = sbr.rel (0) target = $region5
    $region4: #{tpu_custom_call.1} parent=1 // pred_region
      _
    $region5: #{tpu_custom_call.1} parent=1 // pred_fallthru
      _
    // Predicated region
    $region6: #{tpu_custom_call.1} parent=1 // pred_check
      _
    $region7: #{tpu_custom_call.1} parent=1 // pred_check_branch
      %12 = sbr.rel (0) target = $region9
    $region8: #{tpu_custom_call.1} parent=1 // pred_region
      _
    $region9: #{tpu_custom_call.1} parent=1 // pred_fallthru
      _
    // Predicated region
    $region10: #{tpu_custom_call.1} parent=1 // pred_check
      _
    $region11: #{tpu_custom_call.1} parent=1 // pred_check_branch
      %14 = sbr.rel (0) target = $region13
    $region12: #{tpu_custom_call.1} parent=1 // pred_region
      _
    $region13: #{tpu_custom_call.1} parent=1 // pred_fallthru
      _
    %v15 = vld [vmem:[%s0] sm:$0xff]
    %v16 = vld [vmem:[%s1] sm:$0xff]
    %v17 = vld [vmem:[%s2] sm:$0xff]
    %v18 = vlaneseq
    %v19 = vand.u32 %v18, 127
    %vm20 = vcmp.lt.s32.totalorder %v19, 16
    %v21 = vsel %vm20, %v15, -1e+30
    %22 = vset.pattern.permute.xlu0 0
    %23 = vperm.xlu0 %22, %v16
    %v24 = vpop.permute.xlu0 %23
    %vm25 = vcmp.eq.s32.totalorder %v19, %v24
    %26 = vmax.xlane.f32.xlu0 %v21
    %v27 = vpop.xlane.xlu0 %26
    %v28 = vsub.f32 %v21, %v27
    %v29 = vmul.f32 %v28, 1.442695
    %v30 = vpow.pop %v29
    %31 = vadd.xlane.f32.xlu0 %v30
    %v32 = vpop.xlane.xlu0 %31
    %v33 = vsel %vm25, %v21, 0.0
    %34 = vadd.xlane.f32.xlu0 %v33
    %v35 = vpop.xlane.xlu0 %34
    %v36 = vsub.f32 %v35, %v27
    %v37 = vlog2.pop %v32
    %v38 = vmul.f32 %v37, 0.6931472
    %v39 = vsub.f32 %v36, %v38
    %v40 = vmul.f32 %v39, 1.442695
    %v41 = vpow.pop %v40
    %v42 = vsub.f32 1.0, %v41
    %v43 = vsub.f32 0.0, %v17
    %v44 = vmul.f32 %v42, %v42
    %v45 = vmul.f32 %v43, %v44
    %v46 = vmul.f32 %v45, %v39
    %vm47 = vcmask 7168
    %v48 = vsel %vm47, %v46, 0.0
    %49 = vadd.xlane.f32.xlu0 %v48
    %v50 = vpop.xlane.xlu0 %49
    %v51 = vrot.slane %v50, 4
    %v52 = vadd.f32 %v50, %v51
    %v53 = vrot.slane %v52, 2
    %v54 = vadd.f32 %v52, %v53
    %v55 = vrot.slane %v54, 1
    %v56 = vadd.f32 %v54, %v55
    %s57 = vtos %v56
    %s58 = scalar_lea.smem [#allocation2], 0
    %59 = sst [smem:[%s58]] %s57
    // Predicated region
    $region14: #{tpu_custom_call.1} parent=1 // pred_check
      _
    $region15: #{tpu_custom_call.1} parent=1 // pred_check_branch
      %61 = sbr.rel (0) target = $region17
    $region16: #{tpu_custom_call.1} parent=1 // pred_region
      %s63 = ssub.s32 16, 16
      %64 = vsyncadd [#allocation3], %s63
      %67 = dma.smem_to_hbm [#allocation2], 16, %s3, [#allocation3]
    $region17: #{tpu_custom_call.1} parent=1 // pred_fallthru
      _
    // Predicated region
    $region18: #{tpu_custom_call.1} parent=1 // pred_check
      _
    $region19: #{tpu_custom_call.1} parent=1 // pred_check_branch
      %69 = sbr.rel (0) target = $region21
    $region20: #{tpu_custom_call.1} parent=1 // pred_region
      %70 = dma.done [#allocation3], 16
    $region21: #{tpu_custom_call.1} parent=1 // pred_fallthru
      _
    %71 = sfence
    %72 = vsyncpa [#allocation3], 1

</llo_original>
